<compile_context>
chip_gen: v7x
topology: tpu7x:2x2x1
jax: 0.10.0
libtpu: 0.0.40
codegen_flags: <defaults>
</compile_context>

<pallas_src>
import jax
import jax.numpy as jnp
from jax.experimental import pallas as pl
from jax.experimental.pallas import tpu as pltpu


# --------------------------- VMEM budgeting --------------------------------

def _pad8(x):
    return ((int(x) + 7) // 8) * 8


def _pad128(x):
    return ((int(x) + 127) // 128) * 128


def _derive_vmem_limit():
    """Per-generation VMEM limit with headroom for Mosaic internals."""
    cap = 64 * 1024 * 1024                       # conservative default (v7x)
    try:
        info = pltpu.get_tpu_info()
        cap = int(getattr(info, "vmem_capacity_bytes", cap)) or cap
    except Exception:
        pass
    return max(16 * 1024 * 1024,
               min(cap - 16 * 1024 * 1024, int(cap * 0.8)))


_VMEM_LIMIT = _derive_vmem_limit()
_MATMUL_BUDGET = int(_VMEM_LIMIT * 0.8)          # conv matmul tile budget
_BATCH_BUDGET = int(_VMEM_LIMIT * 0.6)           # type-0 batch-tile budget


# ----------------------------- Pallas kernels ------------------------------

def _bmm_vpu_kernel(u_ref, v_ref, o_ref):
    # u:(bt,n,r) v:(bt,m,r) o:(bt,n*m).  out[b, i*m+j] = sum_r u[b,i,r]*v[b,j,r]
    # Small-factor path: per-batch matmuls would use <0.1% of an MXU tile, so
    # the contraction runs on the VPU at full vreg width and the store is a
    # single lane-dense (bt, n*m) block (no wrapper reshape afterwards).
    u = u_ref[...]
    v = v_ref[...]
    n, m = u.shape[1], v.shape[1]
    for i in range(n):                                        # static unroll
        o_ref[:, i * m:(i + 1) * m] = jnp.sum(u[:, i:i + 1, :] * v, axis=-1)


def _bmm_mxu_kernel(u_ref, v_ref, o_ref):
    # Large-factor fallback (n, m >= 128): batched MXU matmul.
    o_ref[...] = jnp.einsum('bnr,bmr->bnm', u_ref[...], v_ref[...],
                            preferred_element_type=jnp.float32)


def _pool_kernel(u_ref, v_ref, o_ref):
    # mean_{n,m}(u @ v^T) == (sum_n u) . (sum_m v) / (n*m)  per batch element.
    # Output block is (1, bt): batch on the lane axis -> dense, unmasked store.
    inv = 1.0 / float(u_ref.shape[1] * v_ref.shape[1])
    us = jnp.sum(u_ref[...], axis=1)                          # (bt, r)
    vs = jnp.sum(v_ref[...], axis=1)                          # (bt, r)
    res = jnp.sum(us * vs, axis=-1, keepdims=True) * inv      # (bt, 1)
    o_ref[...] = jnp.swapaxes(res, 0, 1)                      # (1, bt)


def _matmul_kernel(x_ref, w_ref, o_ref, acc_ref):
    # x:(tm,tk) w:(tk,tn) o:(tm,tn); grid axis 2 is the K loop.
    @pl.when(pl.program_id(2) == 0)
    def _():
        acc_ref[...] = jnp.zeros_like(acc_ref)

    acc_ref[...] += jnp.dot(x_ref[...], w_ref[...],
                            preferred_element_type=jnp.float32)

    @pl.when(pl.program_id(2) == pl.num_programs(2) - 1)
    def _():
        o_ref[...] = acc_ref[...].astype(o_ref.dtype)


# ------------------------------ tile helpers -------------------------------

def _pick_batch_tile(bs, per_item_bytes, budget, align):
    """Largest bt dividing bs whose padded footprint fits `budget`; bt must be
    a multiple of `align` (output-block tiling legality) or bs itself."""
    cands = [t for t in range(1, bs + 1)
             if bs % t == 0 and (t == bs or align <= 1 or t % align == 0)]
    fitting = [t for t in cands if t * per_item_bytes <= budget]
    return max(fitting) if fitting else min(cands)


def _matmul_tiles(R, P, N, budget):
    """(tm, tk, tn) for xcol(R,P) @ W(P,N) under a padded-footprint budget."""
    item = 4

    def fp(tm, tk, tn):
        # double-buffered inputs + double-buffered output + f32 accumulator,
        # all rounded up to (8, 128) vreg tiles.
        return item * (2 * (_pad8(tm) * _pad128(tk) + _pad8(tk) * _pad128(tn))
                       + 3 * _pad8(tm) * _pad128(tn))

    # xcol-resident fast path: tk == P (no K loop) so xcol's block index never
    # changes along j and it is DMA'd exactly once.  tm = R/2 first so a
    # dual-TensorCore chip (v7x) still gets >= 2 parallel tiles.
    tm_opts = [R // 2, R] if (R % 16 == 0 and R >= 16) else [R]
    tn_opts = [N] + [c for c in (2048, 1024, 512, 256, 128)
                     if c < N and N % c == 0]
    for tm in tm_opts:
        for tn in tn_opts:
            if fp(tm, P, tn) <= budget:
                return tm, P, tn

    # General K-tiled path; prefer 256-multiples (v6e/v7x MXU is 2x256^2).
    def pick(dim, cands):
        for c in cands:
            if c <= dim and dim % c == 0:
                return c
        return dim                                # full extent is always legal

    tm = pick(R, (512, 256, 128, 64, 32, 16, 8))
    tk = pick(P, (512, 256, 128))
    tn = pick(N, (1024, 512, 256, 128))
    # Re-validate the combined footprint and shrink (keeping legality).
    while fp(tm, tk, tn) > budget:
        if tn >= 256 and N % (tn // 2) == 0 and (tn // 2) % 128 == 0:
            tn //= 2
        elif tm >= 16 and R % (tm // 2) == 0 and (tm // 2) % 8 == 0:
            tm //= 2
        elif tk >= 256 and P % (tk // 2) == 0 and (tk // 2) % 128 == 0:
            tk //= 2
        else:
            break              # cannot shrink legally; rely on limit headroom
    return tm, tk, tn


# ------------------------------- Module port -------------------------------

class InvariantOutput:
    """JAX/Pallas port of llm/metanet InvariantOutput."""

    def __init__(self, n, m, d=16, layer_type=0, width_mul=2, pool_mean=False,
                 key=None, matmul_dtype=jnp.float32):
        if key is None:
            key = jax.random.PRNGKey(0)
        self.layer_type = layer_type
        self.d = d
        self.pool_mean = pool_mean
        self.matmul_dtype = matmul_dtype
        if layer_type == 0:
            self.m = m
            self.n = n
            # NOTE: matches torch — this parameter is *not* used in forward().
            self.x = jax.random.normal(key, (d, m), jnp.float32)
            self.num_elem = 1 if pool_mean else m * n
        else:
            self.kernel_size, self.stride, self.padding = (layer_type, 1, 0)
            width = round(width_mul * self.kernel_size)
            tot = self.kernel_size ** 2 + 1
            num_in_channels = (n + m) // tot
            num_out_channels = n + m - self.kernel_size ** 2 * num_in_channels
            self.m = num_in_channels
            self.n = num_out_channels
            self.out_image_dim = (width + 2 * self.padding
                                  - self.kernel_size) // self.stride + 1
            self.num_elem = self.d * self.n * self.out_image_dim ** 2
            self.x = jax.random.normal(
                key, (d, self.m, width, width), jnp.float32)  # NCHW parameter

            # Precompute im2col of the fixed parameter x ONCE:
            # NCHW (d, m_in, w, w) -> (d*od*od, m_in*k*k); rows flatten
            # (d, i, j), cols flatten (c, ki, kj) like torch's weight reshape.
            k, od = self.kernel_size, self.out_image_dim
            patches = jnp.stack(
                [self.x[:, :, ki:ki + od, kj:kj + od]
                 for ki in range(k) for kj in range(k)], axis=2)  # (d,m,k*k,od,od)
            xcol = patches.reshape(d, self.m * k * k, od, od)
            self.xcol = xcol.transpose(0, 2, 3, 1).reshape(
                d * od * od, self.m * k * k).astype(matmul_dtype)

    # ------------------------------------------------------------------ #
    def __call__(self, u, v):
        if self.layer_type == 0:
            bs, n, r = u.shape
            m = v.shape[1]

            if self.pool_mean:
                per_item = 4 * (2 * (_pad8(n) + _pad8(m)) * _pad128(r)
                                + 2 * _pad128(r) + 256)
                bt = _pick_batch_tile(bs, per_item, _BATCH_BUDGET, align=128)
                out = pl.pallas_call(
                    _pool_kernel,
                    out_shape=jax.ShapeDtypeStruct((1, bs), jnp.float32),
                    grid=(bs // bt,),
                    in_specs=[pl.BlockSpec((bt, n, r), lambda b: (b, 0, 0)),
                              pl.BlockSpec((bt, m, r), lambda b: (b, 0, 0))],
                    out_specs=pl.BlockSpec((1, bt), lambda b: (0, b)),
                    compiler_params=pltpu.CompilerParams(
                        dimension_semantics=("parallel",),
                        vmem_limit_bytes=_VMEM_LIMIT),
                )(u, v)
                return out.reshape(bs, 1)         # contiguous; final layout

            use_mxu = (n >= 128 and m >= 128) or n > 256
            if use_mxu:
                per_item = 4 * (2 * (_pad8(n) + _pad8(m)) * _pad128(r)
                                + 3 * _pad8(n) * _pad128(m))
                bt = _pick_batch_tile(bs, per_item, _BATCH_BUDGET, align=1)
                out = pl.pallas_call(
                    _bmm_mxu_kernel,
                    out_shape=jax.ShapeDtypeStruct((bs, n, m), jnp.float32),
                    grid=(bs // bt,),
                    in_specs=[pl.BlockSpec((bt, n, r), lambda b: (b, 0, 0)),
                              pl.BlockSpec((bt, m, r), lambda b: (b, 0, 0))],
                    out_specs=pl.BlockSpec((bt, n, m), lambda b: (b, 0, 0)),
                    compiler_params=pltpu.CompilerParams(
                        dimension_semantics=("parallel",),
                        vmem_limit_bytes=_VMEM_LIMIT),
                )(u, v)
                # TODO(synk): for very large n*m this reshape may relayout; a
                # (bs, n*m)-direct kernel variant would avoid the round trip.
                return out.reshape(bs, -1)

            # Small-factor path: lane-dense (bs, n*m) output, VPU contraction.
            per_item = 4 * (2 * (_pad8(n) + _pad8(m)) * _pad128(r)
                            + 2 * _pad128(n * m) + _pad8(m) * _pad128(r))
            bt = _pick_batch_tile(bs, per_item, _BATCH_BUDGET, align=8)
            return pl.pallas_call(
                _bmm_vpu_kernel,
                out_shape=jax.ShapeDtypeStruct((bs, n * m), jnp.float32),
                grid=(bs // bt,),
                in_specs=[pl.BlockSpec((bt, n, r), lambda b: (b, 0, 0)),
                          pl.BlockSpec((bt, m, r), lambda b: (b, 0, 0))],
                out_specs=pl.BlockSpec((bt, n * m), lambda b: (b, 0)),
                compiler_params=pltpu.CompilerParams(
                    dimension_semantics=("parallel",),
                    vmem_limit_bytes=_VMEM_LIMIT),
            )(u, v)

        # ------------------------ conv branch (layer_type > 0) -------------
        b = u.shape[0]
        k, m_in, n_out, d, od = (self.kernel_size, self.m, self.n, self.d,
                                 self.out_image_dim)
        P = m_in * k * k

        # concat + channel split done in XLA (wrapper) — no in-kernel slicing.
        uv = jnp.concatenate([u, v], axis=1)          # (b, n_out + m_in*k*k, r)
        w2 = uv[:, :n_out, :]                         # (b, n_out, r)  1x1 conv
        w1 = uv[:, n_out:, :]                         # (b, m_in*k*k, r) kxk conv

        # Reassociate the two grouped convs: out = xcol @ (w1 @ w2^T), batch
        # folded onto the matmul N dim (lane-dense; xcol read once).
        # TODO(synk): the 'pbq' transpose and the final output transpose are
        # XLA-side HBM round trips kept to match the torch output layout.
        wf = jnp.einsum('bpr,bqr->pbq', w1, w2).reshape(P, b * n_out)
        wf = wf.astype(self.matmul_dtype)

        R = self.xcol.shape[0]                        # d * od * od
        Nf = b * n_out
        tm, tk, tn = _matmul_tiles(R, P, Nf, _MATMUL_BUDGET)
        n_ksteps = P // tk

        wf_spec = pl.BlockSpec((tk, tn), lambda i, j, kk: (kk, j))
        if n_ksteps > 2 and tk <= 128:
            # small K tiles: deepen wf buffering to hide exposed DMA latency.
            wf_spec = pl.BlockSpec((tk, tn), lambda i, j, kk: (kk, j),
                                   pipeline_mode=pl.Buffered(3))

        out = pl.pallas_call(
            _matmul_kernel,
            out_shape=jax.ShapeDtypeStruct((R, Nf), jnp.float32),
            grid_spec=pltpu.PrefetchScalarGridSpec(
                num_scalar_prefetch=0,
                grid=(R // tm, Nf // tn, n_ksteps),
                in_specs=[pl.BlockSpec((tm, tk), lambda i, j, kk: (i, kk)),
                          wf_spec],
                out_specs=pl.BlockSpec((tm, tn), lambda i, j, kk: (i, j)),
                scratch_shapes=[pltpu.VMEM((tm, tn), jnp.float32)]),
            compiler_params=pltpu.CompilerParams(
                dimension_semantics=("parallel", "parallel", "arbitrary"),
                vmem_limit_bytes=_VMEM_LIMIT),
        )(self.xcol, wf)

        # (d*od*od, b*n_out) -> (b, d, n_out, od, od)  (matches torch swapaxes)
        return out.reshape(d, od, od, b, n_out).transpose(3, 0, 4, 1, 2)


# ------------------------------- references --------------------------------

def _ref_type0(u, v, pool_mean):
    s = jnp.einsum('bnr,bmr->bnm', u, v)
    if pool_mean:
        return s.mean(axis=(1, 2))[:, None]
    return s.reshape(s.shape[0], -1)


def _ref_conv(u, v, x, k, m_in, n_out, od):
    uv = jnp.concatenate([u, v], axis=1)
    b, _, r = uv.shape
    d = x.shape[0]
    w1 = uv[:, n_out:, :].reshape(b, m_in, k, k, r).transpose(0, 4, 1, 2, 3)
    w2 = uv[:, :n_out, :]
    patches = jnp.stack([x[:, :, ki:ki + od, kj:kj + od]
                         for ki in range(k) for kj in range(k)], axis=2)
    patches = patches.reshape(d, m_in, k, k, od, od)
    out1 = jnp.einsum('dcxyij,bocxy->bdoij', patches, w1)
    return jnp.einsum('bdoij,bqo->bdqij', out1, w2)


# ----------------------------------- main -----------------------------------

if __name__ == "__main__":
    key = jax.random.PRNGKey(0)
    k_u, k_v, k_p = jax.random.split(key, 3)

    bs, n, m, r, d = 2, 6, 4, 8, 16
    u = jax.random.normal(k_u, (bs, n, r), jnp.float32)
    v = jax.random.normal(k_v, (bs, m, r), jnp.float32)

    # layer_type == 0, pool_mean = False
    mod0 = InvariantOutput(n, m, d=d, layer_type=0, pool_mean=False, key=k_p)
    out0 = jax.block_until_ready(mod0(u, v))
    assert out0.shape == (bs, n * m)
    assert jnp.allclose(out0, _ref_type0(u, v, False), atol=1e-4, rtol=1e-4)

    # layer_type == 0, pool_mean = True
    mod0p = InvariantOutput(n, m, d=d, layer_type=0, pool_mean=True, key=k_p)
    out0p = jax.block_until_ready(mod0p(u, v))
    assert out0p.shape == (bs, 1)
    assert jnp.allclose(out0p, _ref_type0(u, v, True), atol=1e-4, rtol=1e-4)

    # layer_type == 2 (2x2 grouped-conv branch)
    mod2 = InvariantOutput(n, m, d=d, layer_type=2, width_mul=2, key=k_p)
    out2 = jax.block_until_ready(mod2(u, v))
    od = mod2.out_image_dim
    assert out2.shape == (bs, d, mod2.n, od, od)
    ref2 = _ref_conv(u, v, mod2.x, mod2.kernel_size, mod2.m, mod2.n, od)
    assert jnp.allclose(out2, ref2, atol=1e-4, rtol=1e-4)

    print("KERNEL_OK")
</pallas_src>

<mosaic_0001>
module attributes {stable_mosaic.version = 11 : i64} {
  func.func @_bmm_vpu_kernel(%arg0: i32, %arg1: memref<2x6x8xf32, #tpu.memory_space<vmem>>, %arg2: memref<2x4x8xf32, #tpu.memory_space<vmem>>, %arg3: memref<2x24xf32, #tpu.memory_space<vmem>>) attributes {dimension_semantics = [#tpu.dimension_semantics<parallel>], iteration_bounds = array<i64: 1>, scalar_prefetch = 0 : i64, scratch_operands = 0 : i64, tpu.core_type = #tpu.core_type<tc>, window_params = [{transform_indices = @transform_0, window_bounds = array<i64: 2, 6, 8>}, {transform_indices = @transform_1, window_bounds = array<i64: 2, 4, 8>}, {transform_indices = @transform_2, window_bounds = array<i64: 2, 24>}]} {
    %c0 = arith.constant 0 : index
    %c0_0 = arith.constant 0 : index
    %c0_1 = arith.constant 0 : index
    %0 = vector.load %arg1[%c0, %c0_0, %c0_1] : memref<2x6x8xf32, #tpu.memory_space<vmem>>, vector<2x6x8xf32>
    %c0_2 = arith.constant 0 : index
    %c0_3 = arith.constant 0 : index
    %c0_4 = arith.constant 0 : index
    %1 = vector.load %arg2[%c0_2, %c0_3, %c0_4] : memref<2x4x8xf32, #tpu.memory_space<vmem>>, vector<2x4x8xf32>
    %2 = vector.extract_strided_slice %0 {offsets = [0, 0, 0], sizes = [2, 1, 8], strides = [1, 1, 1]} : vector<2x6x8xf32> to vector<2x1x8xf32>
    %3 = vector.broadcast %2 : vector<2x1x8xf32> to vector<2x4x8xf32>
    %4 = arith.mulf %3, %1 : vector<2x4x8xf32>
    %cst = arith.constant dense<0.000000e+00> : vector<2x4xf32>
    %5 = vector.multi_reduction <add>, %4, %cst [2] : vector<2x4x8xf32> to vector<2x4xf32>
    %c0_5 = arith.constant 0 : index
    %c0_6 = arith.constant 0 : index
    %6 = vector.load %arg3[%c0_5, %c0_6] : memref<2x24xf32, #tpu.memory_space<vmem>>, vector<2x4xf32>
    tpu.vector_store %arg3[%c0_5, %c0_6], %5 {strides = array<i32>} : memref<2x24xf32, #tpu.memory_space<vmem>>, vector<2x4xf32>,
    %7 = vector.extract_strided_slice %0 {offsets = [0, 1, 0], sizes = [2, 1, 8], strides = [1, 1, 1]} : vector<2x6x8xf32> to vector<2x1x8xf32>
    %8 = vector.broadcast %7 : vector<2x1x8xf32> to vector<2x4x8xf32>
    %9 = arith.mulf %8, %1 : vector<2x4x8xf32>
    %cst_7 = arith.constant dense<0.000000e+00> : vector<2x4xf32>
    %10 = vector.multi_reduction <add>, %9, %cst_7 [2] : vector<2x4x8xf32> to vector<2x4xf32>
    %c0_8 = arith.constant 0 : index
    %c4 = arith.constant 4 : index
    %11 = vector.load %arg3[%c0_8, %c4] : memref<2x24xf32, #tpu.memory_space<vmem>>, vector<2x4xf32>
    tpu.vector_store %arg3[%c0_8, %c4], %10 {strides = array<i32>} : memref<2x24xf32, #tpu.memory_space<vmem>>, vector<2x4xf32>,
    %12 = vector.extract_strided_slice %0 {offsets = [0, 2, 0], sizes = [2, 1, 8], strides = [1, 1, 1]} : vector<2x6x8xf32> to vector<2x1x8xf32>
    %13 = vector.broadcast %12 : vector<2x1x8xf32> to vector<2x4x8xf32>
    %14 = arith.mulf %13, %1 : vector<2x4x8xf32>
    %cst_9 = arith.constant dense<0.000000e+00> : vector<2x4xf32>
    %15 = vector.multi_reduction <add>, %14, %cst_9 [2] : vector<2x4x8xf32> to vector<2x4xf32>
    %c0_10 = arith.constant 0 : index
    %c8 = arith.constant 8 : index
    %16 = vector.load %arg3[%c0_10, %c8] : memref<2x24xf32, #tpu.memory_space<vmem>>, vector<2x4xf32>
    tpu.vector_store %arg3[%c0_10, %c8], %15 {strides = array<i32>} : memref<2x24xf32, #tpu.memory_space<vmem>>, vector<2x4xf32>,
    %17 = vector.extract_strided_slice %0 {offsets = [0, 3, 0], sizes = [2, 1, 8], strides = [1, 1, 1]} : vector<2x6x8xf32> to vector<2x1x8xf32>
    %18 = vector.broadcast %17 : vector<2x1x8xf32> to vector<2x4x8xf32>
    %19 = arith.mulf %18, %1 : vector<2x4x8xf32>
    %cst_11 = arith.constant dense<0.000000e+00> : vector<2x4xf32>
    %20 = vector.multi_reduction <add>, %19, %cst_11 [2] : vector<2x4x8xf32> to vector<2x4xf32>
    %c0_12 = arith.constant 0 : index
    %c12 = arith.constant 12 : index
    %21 = vector.load %arg3[%c0_12, %c12] : memref<2x24xf32, #tpu.memory_space<vmem>>, vector<2x4xf32>
    tpu.vector_store %arg3[%c0_12, %c12], %20 {strides = array<i32>} : memref<2x24xf32, #tpu.memory_space<vmem>>, vector<2x4xf32>,
    %22 = vector.extract_strided_slice %0 {offsets = [0, 4, 0], sizes = [2, 1, 8], strides = [1, 1, 1]} : vector<2x6x8xf32> to vector<2x1x8xf32>
    %23 = vector.broadcast %22 : vector<2x1x8xf32> to vector<2x4x8xf32>
    %24 = arith.mulf %23, %1 : vector<2x4x8xf32>
    %cst_13 = arith.constant dense<0.000000e+00> : vector<2x4xf32>
    %25 = vector.multi_reduction <add>, %24, %cst_13 [2] : vector<2x4x8xf32> to vector<2x4xf32>
    %c0_14 = arith.constant 0 : index
    %c16 = arith.constant 16 : index
    %26 = vector.load %arg3[%c0_14, %c16] : memref<2x24xf32, #tpu.memory_space<vmem>>, vector<2x4xf32>
    tpu.vector_store %arg3[%c0_14, %c16], %25 {strides = array<i32>} : memref<2x24xf32, #tpu.memory_space<vmem>>, vector<2x4xf32>,
    %27 = vector.extract_strided_slice %0 {offsets = [0, 5, 0], sizes = [2, 1, 8], strides = [1, 1, 1]} : vector<2x6x8xf32> to vector<2x1x8xf32>
    %28 = vector.broadcast %27 : vector<2x1x8xf32> to vector<2x4x8xf32>
    %29 = arith.mulf %28, %1 : vector<2x4x8xf32>
    %cst_15 = arith.constant dense<0.000000e+00> : vector<2x4xf32>
    %30 = vector.multi_reduction <add>, %29, %cst_15 [2] : vector<2x4x8xf32> to vector<2x4xf32>
    %c0_16 = arith.constant 0 : index
    %c20 = arith.constant 20 : index
    %31 = vector.load %arg3[%c0_16, %c20] : memref<2x24xf32, #tpu.memory_space<vmem>>, vector<2x4xf32>
    tpu.vector_store %arg3[%c0_16, %c20], %30 {strides = array<i32>} : memref<2x24xf32, #tpu.memory_space<vmem>>, vector<2x4xf32>,
    return
  }
  func.func @transform_0(%arg0: i32) -> (i32, i32, i32) {
    %c0_i32 = arith.constant 0 : i32
    %c0_i32_0 = arith.constant 0 : i32
    %c0_i32_1 = arith.constant 0 : i32
    return %arg0, %c0_i32, %c0_i32_0 : i32, i32, i32
  }
  func.func @transform_1(%arg0: i32) -> (i32, i32, i32) {
    %c0_i32 = arith.constant 0 : i32
    %c0_i32_0 = arith.constant 0 : i32
    %c0_i32_1 = arith.constant 0 : i32
    return %arg0, %c0_i32, %c0_i32_0 : i32, i32, i32
  }
  func.func @transform_2(%arg0: i32) -> (i32, i32) {
    %c0_i32 = arith.constant 0 : i32
    %c0_i32_0 = arith.constant 0 : i32
    return %arg0, %c0_i32 : i32, i32
  }
}

</mosaic_0001>

<llo_original>
// kernel: tpu_custom_call.1
$region0: #{tpu_custom_call.1}
  #allocation0 [shape = 'u32[]', space=smem, size = 0x4, offset = 0x4, fixed_abs, tag = 'smem constant byte address 0x4 - core index']
  #allocation1 [shape = 'u32[144,128]{1,0:T(1,128)}', space=vmem, size = 0x12000, scoped, tag = 'internal scratch']
  %s0 = inlined_call_operand.vmem [shape: f32[2,6,8], index: 0, kind: input, shape index: {}]
  %s1 = inlined_call_operand.vmem [shape: f32[2,4,8], index: 1, kind: input, shape index: {}]
  %s2 = inlined_call_operand.hbm [shape: f32[2,24], index: 2, kind: output, shape index: {}]
  %s3 = sld [smem:[#allocation0]]
  $region18: #{tpu_custom_call.1} parent=0
    _
  %s5 = ssub.s32 1, %s3
  %s6 = scalar_select 0, %s5, %s3
  $region1: #{tpu_custom_call.1} parent=0
    #allocation2 [shape = 'u8[1024]{0}', space=vmem, size = 0x400, scoped, tag = 'output window, operand 0, single buffered']
    #allocation3 [shape = 's32[1]{0}', space=sflag, size = 0x4, scoped, tag = 'scoped memory for tpu_custom_call.1']
    %7 = vsyncpa [#allocation3], 0
    // Predicated region
    $region2: #{tpu_custom_call.1} parent=1 // pred_check
      _
    $region3: #{tpu_custom_call.1} parent=1 // pred_check_branch
      %9 = sbr.rel (0) target = $region5
    $region4: #{tpu_custom_call.1} parent=1 // pred_region
      _
    $region5: #{tpu_custom_call.1} parent=1 // pred_fallthru
      _
    // Predicated region
    $region6: #{tpu_custom_call.1} parent=1 // pred_check
      _
    $region7: #{tpu_custom_call.1} parent=1 // pred_check_branch
      %11 = sbr.rel (0) target = $region9
    $region8: #{tpu_custom_call.1} parent=1 // pred_region
      _
    $region9: #{tpu_custom_call.1} parent=1 // pred_fallthru
      _
    %v12 = vld [vmem:[%s0] sm:$0x3f]
    %v13 = vld [vmem:[%s0 + $0x8] sm:$0x3f]
    %v14 = vld [vmem:[%s1] sm:$0xf]
    %v15 = vld [vmem:[%s1 + $0x4] sm:$0xf]
    %v16 = vlaneseq
    %v17 = vshrl.u32 %v16, 7
    %v18 = vsub.s32 0, %v17
    %v19 = vrot.slane %v12, %v18
    %v20 = vlaneseq
    %v21 = vshrl.u32 %v20, 7
    %v22 = vsub.s32 0, %v21
    %v23 = vrot.slane %v13, %v22
    %v24 = vmul.f32 %v19, %v14
    %v25 = vmul.f32 %v23, %v15
    %vm26 = vcmask 60416
    %v27 = vsel %vm26, %v24, 0.0
    %28 = vadd.xlane.f32.xlu0 %v27
    %v29 = vpop.xlane.xlu0 %28
    %v30 = vsel %vm26, %v25, 0.0
    %31 = vadd.xlane.f32.xlu0 %v30
    %v32 = vpop.xlane.xlu0 %31
    %v35 = vlaneseq
    %v36 = vand.u32 %v35, 127
    %v37 = vlaneseq
    %v38 = vshrl.u32 %v37, 7
    %v39 = vsub.s32 %v36, %v38
    %v40 = vrot.slane %v29, %v39
    %v41 = vlaneseq
    %v42 = vshrl.u32 %v41, 7
    %v43 = vsub.s32 %v36, %v42
    %v44 = vrot.slane %v32, %v43
    %vm45 = vcmask 1041409
    %v46 = vsel %vm45, %v44, %v40
    %vm48 = vcmask 25600
    %49 = vst.msk [vmem:[#allocation2] sm:$0x3] %vm48, %v46
    %v50 = vlaneseq
    %v51 = vshrl.u32 %v50, 7
    %v52 = vsub.s32 1, %v51
    %v53 = vrot.slane %v12, %v52
    %v54 = vlaneseq
    %v55 = vshrl.u32 %v54, 7
    %v56 = vsub.s32 1, %v55
    %v57 = vrot.slane %v13, %v56
    %v58 = vmul.f32 %v53, %v14
    %v59 = vmul.f32 %v57, %v15
    %v60 = vsel %vm26, %v58, 0.0
    %61 = vadd.xlane.f32.xlu0 %v60
    %v62 = vpop.xlane.xlu0 %61
    %v63 = vsel %vm26, %v59, 0.0
    %64 = vadd.xlane.f32.xlu0 %v63
    %v65 = vpop.xlane.xlu0 %64
    %v68 = vadd.s32 %v36, 4294967292
    %v69 = vlaneseq
    %v70 = vshrl.u32 %v69, 7
    %v71 = vsub.s32 %v68, %v70
    %v72 = vrot.slane %v62, %v71
    %v73 = vlaneseq
    %v74 = vshrl.u32 %v73, 7
    %v75 = vsub.s32 %v68, %v74
    %v76 = vrot.slane %v65, %v75
    %v77 = vsel %vm45, %v76, %v72
    %vm79 = vcmask 58400
    %80 = vst.msk [vmem:[#allocation2] sm:$0x3] %vm79, %v77
    %v81 = vlaneseq
    %v82 = vshrl.u32 %v81, 7
    %v83 = vsub.s32 2, %v82
    %v84 = vrot.slane %v12, %v83
    %v85 = vlaneseq
    %v86 = vshrl.u32 %v85, 7
    %v87 = vsub.s32 2, %v86
    %v88 = vrot.slane %v13, %v87
    %v89 = vmul.f32 %v84, %v14
    %v90 = vmul.f32 %v88, %v15
    %v91 = vsel %vm26, %v89, 0.0
    %92 = vadd.xlane.f32.xlu0 %v91
    %v93 = vpop.xlane.xlu0 %92
    %v94 = vsel %vm26, %v90, 0.0
    %95 = vadd.xlane.f32.xlu0 %v94
    %v96 = vpop.xlane.xlu0 %95
    %v99 = vadd.s32 %v36, 4294967288
    %v100 = vlaneseq
    %v101 = vshrl.u32 %v100, 7
    %v102 = vsub.s32 %v99, %v101
    %v103 = vrot.slane %v93, %v102
    %v104 = vlaneseq
    %v105 = vshrl.u32 %v104, 7
    %v106 = vsub.s32 %v99, %v105
    %v107 = vrot.slane %v96, %v106
    %v108 = vsel %vm45, %v107, %v103
    %vm110 = vcmask 91200
    %111 = vst.msk [vmem:[#allocation2] sm:$0x3] %vm110, %v108
    %v112 = vlaneseq
    %v113 = vshrl.u32 %v112, 7
    %v114 = vsub.s32 3, %v113
    %v115 = vrot.slane %v12, %v114
    %v116 = vlaneseq
    %v117 = vshrl.u32 %v116, 7
    %v118 = vsub.s32 3, %v117
    %v119 = vrot.slane %v13, %v118
    %v120 = vmul.f32 %v115, %v14
    %v121 = vmul.f32 %v119, %v15
    %v122 = vsel %vm26, %v120, 0.0
    %123 = vadd.xlane.f32.xlu0 %v122
    %v124 = vpop.xlane.xlu0 %123
    %v125 = vsel %vm26, %v121, 0.0
    %126 = vadd.xlane.f32.xlu0 %v125
    %v127 = vpop.xlane.xlu0 %126
    %v130 = vadd.s32 %v36, 4294967284
    %v131 = vlaneseq
    %v132 = vshrl.u32 %v131, 7
    %v133 = vsub.s32 %v130, %v132
    %v134 = vrot.slane %v124, %v133
    %v135 = vlaneseq
    %v136 = vshrl.u32 %v135, 7
    %v137 = vsub.s32 %v130, %v136
    %v138 = vrot.slane %v127, %v137
    %v139 = vsel %vm45, %v138, %v134
    %vm141 = vcmask 124000
    %142 = vst.msk [vmem:[#allocation2] sm:$0x3] %vm141, %v139
    %v143 = vlaneseq
    %v144 = vshrl.u32 %v143, 7
    %v145 = vsub.s32 4, %v144
    %v146 = vrot.slane %v12, %v145
    %v147 = vlaneseq
    %v148 = vshrl.u32 %v147, 7
    %v149 = vsub.s32 4, %v148
    %v150 = vrot.slane %v13, %v149
    %v151 = vmul.f32 %v146, %v14
    %v152 = vmul.f32 %v150, %v15
    %v153 = vsel %vm26, %v151, 0.0
    %154 = vadd.xlane.f32.xlu0 %v153
    %v155 = vpop.xlane.xlu0 %154
    %v156 = vsel %vm26, %v152, 0.0
    %157 = vadd.xlane.f32.xlu0 %v156
    %v158 = vpop.xlane.xlu0 %157
    %v161 = vadd.s32 %v36, 4294967280
    %v162 = vlaneseq
    %v163 = vshrl.u32 %v162, 7
    %v164 = vsub.s32 %v161, %v163
    %v165 = vrot.slane %v155, %v164
    %v166 = vlaneseq
    %v167 = vshrl.u32 %v166, 7
    %v168 = vsub.s32 %v161, %v167
    %v169 = vrot.slane %v158, %v168
    %v170 = vsel %vm45, %v169, %v165
    %vm172 = vcmask 156800
    %173 = vst.msk [vmem:[#allocation2] sm:$0x3] %vm172, %v170
    %v174 = vlaneseq
    %v175 = vshrl.u32 %v174, 7
    %v176 = vsub.s32 5, %v175
    %v177 = vrot.slane %v12, %v176
    %v178 = vlaneseq
    %v179 = vshrl.u32 %v178, 7
    %v180 = vsub.s32 5, %v179
    %v181 = vrot.slane %v13, %v180
    %v182 = vmul.f32 %v177, %v14
    %v183 = vmul.f32 %v181, %v15
    %v184 = vsel %vm26, %v182, 0.0
    %185 = vadd.xlane.f32.xlu0 %v184
    %v186 = vpop.xlane.xlu0 %185
    %v187 = vsel %vm26, %v183, 0.0
    %188 = vadd.xlane.f32.xlu0 %v187
    %v189 = vpop.xlane.xlu0 %188
    %v192 = vadd.s32 %v36, 4294967276
    %v193 = vlaneseq
    %v194 = vshrl.u32 %v193, 7
    %v195 = vsub.s32 %v192, %v194
    %v196 = vrot.slane %v186, %v195
    %v197 = vlaneseq
    %v198 = vshrl.u32 %v197, 7
    %v199 = vsub.s32 %v192, %v198
    %v200 = vrot.slane %v189, %v199
    %v201 = vsel %vm45, %v200, %v196
    %vm203 = vcmask 189600
    %204 = vst.msk [vmem:[#allocation2] sm:$0x3] %vm203, %v201
    // Predicated region
    $region10: #{tpu_custom_call.1} parent=1 // pred_check
      _
    $region11: #{tpu_custom_call.1} parent=1 // pred_check_branch
      %206 = sbr.rel (0) target = $region13
    $region12: #{tpu_custom_call.1} parent=1 // pred_region
      %s208 = ssub.s32 32, 32
      %209 = vsyncadd [#allocation3], %s208
      %s211 = sshll.u32 [#allocation2], 4
      %s212 = int_to_ptr.vmem [resolvable:$true] %s211
      %214 = dma.vmem_to_hbm [thread:$0]  %s212, 32, %s2, [#allocation3]
    $region13: #{tpu_custom_call.1} parent=1 // pred_fallthru
      _
    // Predicated region
    $region14: #{tpu_custom_call.1} parent=1 // pred_check
      _
    $region15: #{tpu_custom_call.1} parent=1 // pred_check_branch
      %216 = sbr.rel (0) target = $region17
    $region16: #{tpu_custom_call.1} parent=1 // pred_region
      %217 = dma.done [#allocation3], 32
    $region17: #{tpu_custom_call.1} parent=1 // pred_fallthru
      _
    %218 = vsyncpa [#allocation3], 1

</llo_original>
